<compile_context>
chip_gen: v7x
topology: tpu7x:2x2x1
jax: 0.10.0
libtpu: 0.0.40
codegen_flags: <defaults>
</compile_context>

<pallas_src>
import functools

import jax
import jax.numpy as jnp
from jax.experimental import pallas as pl
from jax.experimental.pallas import tpu as pltpu

KSIZE = 5
PAD = 2
HIDDEN_DIM = 32
INPUT_DIM = 64  # each 8x8 patch flattened -> 64, as the PyTorch forward implies


# ----------------------------------------------------------------------------
# Pallas kernels
# ----------------------------------------------------------------------------
def wx_relu_kernel(w_ref, x_ref, o_ref):
    """o = relu(w @ x) for one column-tile of x. Output rows = Cout (lane-dense cols)."""
    o_ref[...] = jnp.maximum(
        jnp.dot(w_ref[...], x_ref[...], preferred_element_type=jnp.float32),
        0.0,
    )


def conv_as_matmul_relu_T(w_rows, patches_T, tn=512):
    """w_rows: (Cout, K); patches_T: (K, M). Returns relu(w_rows @ patches_T): (Cout, M).

    Computed transposed so the kernel output tile is (Cout, tn) with a 128-lane
    dense minor dim (tn), instead of (tm, Cout) with Cout in {1, 16} masked lanes.
    """
    Cout, K = w_rows.shape
    _, M = patches_T.shape
    n_tiles = pl.cdiv(M, tn)
    Mp = n_tiles * tn
    if Mp != M:
        patches_T = jnp.pad(patches_T, ((0, 0), (0, Mp - M)))
    out = pl.pallas_call(
        wx_relu_kernel,
        out_shape=jax.ShapeDtypeStruct((Cout, Mp), jnp.float32),
        grid=(n_tiles,),
        in_specs=[
            pl.BlockSpec((Cout, K), lambda j: (0, 0)),
            pl.BlockSpec((K, tn), lambda j: (0, j)),
        ],
        out_specs=pl.BlockSpec((Cout, tn), lambda j: (0, j)),
        compiler_params=pltpu.CompilerParams(dimension_semantics=("parallel",)),
    )(w_rows, patches_T)
    return out[:, :M]


def lstm3_kernel(x_ref,
                 wih0_ref, whh0_ref, b0_ref,
                 wih1_ref, whh1_ref, b1_ref,
                 wih2_ref, whh2_ref, b2_ref,
                 out_ref,
                 gates_ref, hseq_ref,
                 *, batch, seq_len):
    """3-layer LSTM, PyTorch gate order (i, f, g, o). Fully batched, one invocation.

    Row layout for sequences is (t*B + b):
      x_ref:     (T*B, D)   flattened input sequence (all batch elements)
      wih*_ref:  (in_l, 4H) (already transposed)
      whh*_ref:  (H, 4H)    (already transposed)
      b*_ref:    (1, 4H)    (b_ih + b_hh)
      out_ref:   (T*B, H)   last layer outputs
      gates_ref: (T*B, 4H)  VMEM scratch: pre-projected gates for the current layer
      hseq_ref:  (T*B, H)   VMEM scratch: current layer's per-step outputs
    """
    B, T = batch, seq_len
    H = whh0_ref.shape[0]
    G = 4 * H

    # Hoisted lane mask: g-gate occupies lanes [2H, 3H) of the 4H(=128)-wide gate vector.
    lane = jax.lax.broadcasted_iota(jnp.int32, (1, G), 1)
    g_mask = (lane >= 2 * H) & (lane < 3 * H)

    def recur(whh_ref, dst_ref):
        whh = whh_ref[...]  # hoisted out of the timestep loop
        h = jnp.zeros((B, H), jnp.float32)
        c = jnp.zeros((B, H), jnp.float32)
        # T = (H/8)*(W/8) is small, so a static unroll keeps every slice static
        # (no dynamic sublane offsets) and exposes the whole recurrence to the
        # scheduler.  Only the batched recurrent matmul is on the serial path.
        # TODO(synk): for very long sequences switch to lax.fori_loop + pl.ds.
        for t in range(T):
            g = gates_ref[t * B:(t + 1) * B, :] + jnp.dot(
                h, whh, preferred_element_type=jnp.float32)
            # Full-vreg activations (EUP) + one select instead of four 32-lane slices.
            act = jnp.where(g_mask, jnp.tanh(g), jax.nn.sigmoid(g))
            i_g = act[:, 0 * H:1 * H]
            f_g = act[:, 1 * H:2 * H]
            g_g = act[:, 2 * H:3 * H]
            o_g = act[:, 3 * H:4 * H]
            c = f_g * c + i_g * g_g
            h = o_g * jnp.tanh(c)
            dst_ref[t * B:(t + 1) * B, :] = h

    # Layer 0: hoisted input projection over all (t, b) rows, then the recurrence.
    gates_ref[...] = (
        jnp.dot(x_ref[...], wih0_ref[...], preferred_element_type=jnp.float32)
        + b0_ref[...])
    recur(whh0_ref, hseq_ref)

    # Layer 1 (input = previous layer's outputs, consumed entirely by the pre-projection).
    gates_ref[...] = (
        jnp.dot(hseq_ref[...], wih1_ref[...], preferred_element_type=jnp.float32)
        + b1_ref[...])
    recur(whh1_ref, hseq_ref)

    # Layer 2: recurrence writes straight into the output block (no final copy).
    gates_ref[...] = (
        jnp.dot(hseq_ref[...], wih2_ref[...], preferred_element_type=jnp.float32)
        + b2_ref[...])
    recur(whh2_ref, out_ref)


def lstm3(xy, lstm_params):
    """xy: (B, T, D); lstm_params: list of 3 tuples (wih_T, whh_T, b). Returns (B, T, H)."""
    B, T, D = xy.shape
    H = lstm_params[0][1].shape[0]
    (wih0, whh0, b0), (wih1, whh1, b1), (wih2, whh2, b2) = lstm_params

    # Flatten to rows (t*B + b) so each layer's input projection is one matmul.
    x_flat = jnp.transpose(xy, (1, 0, 2)).reshape(T * B, D)

    out_flat = pl.pallas_call(
        functools.partial(lstm3_kernel, batch=B, seq_len=T),
        out_shape=jax.ShapeDtypeStruct((T * B, H), jnp.float32),
        grid=(1,),
        in_specs=[
            pl.BlockSpec((T * B, D), lambda i: (0, 0)),
            pl.BlockSpec(wih0.shape, lambda i: (0, 0)),
            pl.BlockSpec(whh0.shape, lambda i: (0, 0)),
            pl.BlockSpec(b0.shape, lambda i: (0, 0)),
            pl.BlockSpec(wih1.shape, lambda i: (0, 0)),
            pl.BlockSpec(whh1.shape, lambda i: (0, 0)),
            pl.BlockSpec(b1.shape, lambda i: (0, 0)),
            pl.BlockSpec(wih2.shape, lambda i: (0, 0)),
            pl.BlockSpec(whh2.shape, lambda i: (0, 0)),
            pl.BlockSpec(b2.shape, lambda i: (0, 0)),
        ],
        out_specs=pl.BlockSpec((T * B, H), lambda i: (0, 0)),
        scratch_shapes=[
            pltpu.VMEM((T * B, 4 * H), jnp.float32),   # pre-projected gates
            pltpu.VMEM((T * B, H), jnp.float32),       # current layer outputs
        ],
    )(x_flat, wih0, whh0, b0, wih1, whh1, b1, wih2, whh2, b2)

    return jnp.transpose(out_flat.reshape(T, B, H), (1, 0, 2))


# ----------------------------------------------------------------------------
# JAX glue: transposed im2col, patch/sequence extraction, parameter setup
# ----------------------------------------------------------------------------
def im2col_T(x_bchw, ksize=KSIZE, pad=PAD):
    """(B, C, H, W) -> (C*k*k, B*H*W); row = (ky*k+kx)*C + c, col = b*H*W + h*W + w."""
    B, C, H, W = x_bchw.shape
    xp = jnp.pad(x_bchw, ((0, 0), (0, 0), (pad, pad), (pad, pad)))
    taps = []
    for ky in range(ksize):
        for kx in range(ksize):
            taps.append(xp[:, :, ky:ky + H, kx:kx + W])   # (B, C, H, W)
    stk = jnp.stack(taps, axis=0)                         # (k*k, B, C, H, W)
    stk = jnp.transpose(stk, (0, 2, 1, 3, 4))             # (k*k, C, B, H, W)
    return stk.reshape(ksize * ksize * C, B * H * W)


def conv_weight_rows(w_oihw):
    """(Cout, Cin, k, k) -> (Cout, k*k*Cin) matching im2col_T row order."""
    Cout, Cin, kh, kw = w_oihw.shape
    return jnp.transpose(w_oihw, (0, 2, 3, 1)).reshape(Cout, kh * kw * Cin)


def extract_seq(y_bhw):
    """Replicates y.split(8,dim=3) -> split(8,dim=2) -> cat(dim=1) -> view(bs,c,64)."""
    B, H, W = y_bhw.shape
    patches = []
    for wj in range(W // 8):
        for hi in range(H // 8):
            p = y_bhw[:, hi * 8:(hi + 1) * 8, wj * 8:(wj + 1) * 8]  # (B, 8, 8)
            patches.append(p.reshape(B, 64))
    return jnp.stack(patches, axis=1)  # (B, T, 64)


def init_params(key, input_dim=INPUT_DIM, hidden_dim=HIDDEN_DIM):
    keys = jax.random.split(key, 16)
    k1 = 1.0 / jnp.sqrt(3.0 * KSIZE * KSIZE)
    conv1_w = jax.random.uniform(keys[0], (16, 3, KSIZE, KSIZE), jnp.float32, -k1, k1)
    k2 = 1.0 / jnp.sqrt(16.0 * KSIZE * KSIZE)
    conv2_w = jax.random.uniform(keys[1], (1, 16, KSIZE, KSIZE), jnp.float32, -k2, k2)

    kl = 1.0 / jnp.sqrt(float(hidden_dim))
    lstm_params = []
    for layer in range(3):
        in_l = input_dim if layer == 0 else hidden_dim
        kk = jax.random.split(keys[2 + layer], 4)
        w_ih = jax.random.uniform(kk[0], (4 * hidden_dim, in_l), jnp.float32, -kl, kl)
        w_hh = jax.random.uniform(kk[1], (4 * hidden_dim, hidden_dim), jnp.float32, -kl, kl)
        b_ih = jax.random.uniform(kk[2], (4 * hidden_dim,), jnp.float32, -kl, kl)
        b_hh = jax.random.uniform(kk[3], (4 * hidden_dim,), jnp.float32, -kl, kl)
        lstm_params.append((w_ih.T, w_hh.T, (b_ih + b_hh).reshape(1, 4 * hidden_dim)))
    return conv1_w, conv2_w, lstm_params


# ----------------------------------------------------------------------------
# Forward passes
# ----------------------------------------------------------------------------
def lstm_encoder_forward(x_nchw, conv1_w, conv2_w, lstm_params):
    B, C, H, W = x_nchw.shape

    # conv1 (3->16, 5x5, pad 2, no bias) + ReLU: relu(W1 @ patches_T) -> (16, B*H*W)
    p1t = im2col_T(x_nchw)                                        # (75, B*H*W)
    a1t = conv_as_matmul_relu_T(conv_weight_rows(conv1_w), p1t)   # (16, B*H*W)
    a1_bchw = jnp.transpose(a1t.reshape(16, B, H, W), (1, 0, 2, 3))

    # conv2 (16->1, 5x5, pad 2, no bias) + ReLU: relu(W2 @ patches_T) -> (1, B*H*W)
    # TODO(synk): fuse conv1->relu->conv2 in a single kernel to avoid materializing
    #             the 25x im2col intermediate (400 * B*H*W f32) in HBM.
    p2t = im2col_T(a1_bchw)                                       # (400, B*H*W)
    y = conv_as_matmul_relu_T(conv_weight_rows(conv2_w), p2t)[0].reshape(B, H, W)

    # split into 8x8 patches -> sequence (B, T, 64), then 3-layer batched LSTM in Pallas
    xy = extract_seq(y)
    return lstm3(xy, lstm_params)


def reference_forward(x_nchw, conv1_w, conv2_w, lstm_params):
    """Pure-JAX reference matching the PyTorch forward."""
    dn = ('NCHW', 'OIHW', 'NCHW')
    x1 = jax.lax.conv_general_dilated(x_nchw, conv1_w, (1, 1),
                                      [(PAD, PAD), (PAD, PAD)], dimension_numbers=dn)
    x1 = jnp.maximum(x1, 0.0)
    y = jax.lax.conv_general_dilated(x1, conv2_w, (1, 1),
                                     [(PAD, PAD), (PAD, PAD)], dimension_numbers=dn)
    y = jnp.maximum(y, 0.0)[:, 0]                         # (B, H, W)
    layer_in = extract_seq(y)
    for (wih_t, whh_t, b) in lstm_params:
        H = whh_t.shape[0]
        B, T, _ = layer_in.shape
        h = jnp.zeros((B, H), jnp.float32)
        c = jnp.zeros((B, H), jnp.float32)
        outs = []
        for t in range(T):
            gates = layer_in[:, t, :] @ wih_t + h @ whh_t + b
            i_g = jax.nn.sigmoid(gates[:, :H])
            f_g = jax.nn.sigmoid(gates[:, H:2 * H])
            g_g = jnp.tanh(gates[:, 2 * H:3 * H])
            o_g = jax.nn.sigmoid(gates[:, 3 * H:4 * H])
            c = f_g * c + i_g * g_g
            h = o_g * jnp.tanh(c)
            outs.append(h)
        layer_in = jnp.stack(outs, axis=1)
    return layer_in


if __name__ == "__main__":
    key = jax.random.PRNGKey(0)
    k_x, k_p = jax.random.split(key)
    x = jax.random.normal(k_x, (2, 3, 16, 16), jnp.float32)   # (B, 3, H, W), NCHW
    conv1_w, conv2_w, lstm_params = init_params(k_p)

    out = lstm_encoder_forward(x, conv1_w, conv2_w, lstm_params)
    out = jax.block_until_ready(out)

    ref = reference_forward(x, conv1_w, conv2_w, lstm_params)
    assert out.shape == (2, 4, HIDDEN_DIM), out.shape
    assert jnp.allclose(out, ref, atol=1e-2, rtol=1e-2), (
        float(jnp.max(jnp.abs(out - ref))))

    print("KERNEL_OK")
</pallas_src>

<mosaic_0001>
module attributes {stable_mosaic.version = 11 : i64} {
  func.func @wx_relu_kernel(%arg0: i32, %arg1: memref<16x75xf32, #tpu.memory_space<vmem>>, %arg2: memref<75x512xf32, #tpu.memory_space<vmem>>, %arg3: memref<16x512xf32, #tpu.memory_space<vmem>>) attributes {dimension_semantics = [#tpu.dimension_semantics<parallel>], iteration_bounds = array<i64: 1>, scalar_prefetch = 0 : i64, scratch_operands = 0 : i64, tpu.core_type = #tpu.core_type<tc>, window_params = [{pipeline_mode = #tpu.pipeline_mode<synchronous>, transform_indices = @transform_0, window_bounds = array<i64: 16, 75>}, {transform_indices = @transform_1, window_bounds = array<i64: 75, 512>}, {transform_indices = @transform_2, window_bounds = array<i64: 16, 512>}]} {
    %c0 = arith.constant 0 : index
    %c0_0 = arith.constant 0 : index
    %0 = vector.load %arg1[%c0, %c0_0] : memref<16x75xf32, #tpu.memory_space<vmem>>, vector<16x75xf32>
    %c0_1 = arith.constant 0 : index
    %c0_2 = arith.constant 0 : index
    %1 = vector.load %arg2[%c0_1, %c0_2] : memref<75x512xf32, #tpu.memory_space<vmem>>, vector<75x512xf32>
    %cst = arith.constant dense<0.000000e+00> : vector<16x512xf32>
    %2 = tpu.matmul %0, %1, %cst {dimension_numbers = #tpu.dot_dimension_numbers<[1], [0], [0], [1], [0, 0, 1, 1], [], []>} : vector<16x75xf32>, vector<75x512xf32>, vector<16x512xf32> -> vector<16x512xf32>
    %cst_3 = arith.constant 0.000000e+00 : f32
    %3 = vector.broadcast %cst_3 : f32 to vector<16x512xf32>
    %4 = arith.maximumf %2, %3 : vector<16x512xf32>
    %c0_4 = arith.constant 0 : index
    %c0_5 = arith.constant 0 : index
    %5 = vector.load %arg3[%c0_4, %c0_5] : memref<16x512xf32, #tpu.memory_space<vmem>>, vector<16x512xf32>
    tpu.vector_store %arg3[%c0_4, %c0_5], %4 {strides = array<i32>} : memref<16x512xf32, #tpu.memory_space<vmem>>, vector<16x512xf32>,
    return
  }
  func.func @transform_0(%arg0: i32) -> (i32, i32) {
    %c0_i32 = arith.constant 0 : i32
    %c0_i32_0 = arith.constant 0 : i32
    %c0_i32_1 = arith.constant 0 : i32
    return %c0_i32, %c0_i32_0 : i32, i32
  }
  func.func @transform_1(%arg0: i32) -> (i32, i32) {
    %c0_i32 = arith.constant 0 : i32
    %c0_i32_0 = arith.constant 0 : i32
    return %c0_i32, %arg0 : i32, i32
  }
  func.func @transform_2(%arg0: i32) -> (i32, i32) {
    %c0_i32 = arith.constant 0 : i32
    %c0_i32_0 = arith.constant 0 : i32
    return %c0_i32, %arg0 : i32, i32
  }
}

</mosaic_0001>

<llo_original>
// kernel: tpu_custom_call.1
$region0: #{tpu_custom_call.1}
  #allocation0 [shape = 'u32[]', space=smem, size = 0x4, offset = 0x4, fixed_abs, tag = 'smem constant byte address 0x4 - core index']
  #allocation1 [shape = 'u32[144,128]{1,0:T(1,128)}', space=vmem, size = 0x12000, scoped, tag = 'internal scratch']
  %s0 = inlined_call_operand.hbm [shape: f32[16,75], index: 0, kind: input, shape index: {}]
  %s1 = inlined_call_operand.hbm [shape: f32[75,512], index: 1, kind: input, shape index: {}]
  %s2 = inlined_call_operand.hbm [shape: f32[16,512], index: 2, kind: output, shape index: {}]
  %s3 = sld [smem:[#allocation0]]
  $region26: #{tpu_custom_call.1} parent=0
    _
  %s5 = ssub.s32 1, %s3
  %s6 = scalar_select 0, %s5, %s3
  $region1: #{tpu_custom_call.1} parent=0
    #allocation2 [shape = 'u8[8192]{0}', space=vmem, size = 0x2000, scoped, tag = 'input window, operand 0, single buffered']
    #allocation3 [shape = 's32[1]{0}', space=sflag, size = 0x4, scoped, tag = 'scoped memory for tpu_custom_call.1']
    #allocation4 [shape = 's32[1]{0}', space=sflag, size = 0x4, scoped, tag = 'scoped memory for tpu_custom_call.1']
    #allocation5 [shape = 'u8[163840]{0}', space=vmem, size = 0x28000, scoped, tag = 'input window, operand 1, single buffered']
    #allocation6 [shape = 's32[1]{0}', space=sflag, size = 0x4, scoped, tag = 'scoped memory for tpu_custom_call.1']
    #allocation7 [shape = 'u8[32768]{0}', space=vmem, size = 0x8000, scoped, tag = 'output window, operand 0, single buffered']
    %7 = vsyncpa [#allocation3], 0
    %8 = vsyncpa [#allocation6], 0
    %9 = vsyncpa [#allocation4], 0
    // Predicated region
    $region2: #{tpu_custom_call.1} parent=1 // pred_check
      _
    $region3: #{tpu_custom_call.1} parent=1 // pred_check_branch
      %11 = sbr.rel (0) target = $region5
    $region4: #{tpu_custom_call.1} parent=1 // pred_region
      %s13 = ssub.s32 256, 256
      %14 = vsyncadd [#allocation3], %s13
      %s15 = sshll.u32 [#allocation2], 4
      %s16 = int_to_ptr.vmem [resolvable:$true] %s15
      %21 = dma.hbm_to_vmem [thread:$0]  %s0, 256, %s16, [#allocation3], 128, 128, 8
    $region5: #{tpu_custom_call.1} parent=1 // pred_fallthru
      _
    // Predicated region
    $region6: #{tpu_custom_call.1} parent=1 // pred_check
      _
    $region7: #{tpu_custom_call.1} parent=1 // pred_check_branch
      %23 = sbr.rel (0) target = $region9
    $region8: #{tpu_custom_call.1} parent=1 // pred_region
      %s25 = ssub.s32 5120, 5120
      %26 = vsyncadd [#allocation6], %s25
      %s27 = sshll.u32 [#allocation5], 4
      %s28 = int_to_ptr.vmem [resolvable:$true] %s27
      %33 = dma.hbm_to_vmem [thread:$0]  %s1, 5120, %s28, [#allocation6], 512, 512, 32
    $region9: #{tpu_custom_call.1} parent=1 // pred_fallthru
      _
    // Predicated region
    $region10: #{tpu_custom_call.1} parent=1 // pred_check
      _
    $region11: #{tpu_custom_call.1} parent=1 // pred_check_branch
      %35 = sbr.rel (0) target = $region13
    $region12: #{tpu_custom_call.1} parent=1 // pred_region
      %36 = dma.done [#allocation3], 256
    $region13: #{tpu_custom_call.1} parent=1 // pred_fallthru
      _
    // Predicated region
    $region14: #{tpu_custom_call.1} parent=1 // pred_check
      _
    $region15: #{tpu_custom_call.1} parent=1 // pred_check_branch
      %38 = sbr.rel (0) target = $region17
    $region16: #{tpu_custom_call.1} parent=1 // pred_region
      %39 = dma.done [#allocation6], 5120
    $region17: #{tpu_custom_call.1} parent=1 // pred_fallthru
      _
    %v40 = vld [vmem:[#allocation2] sm:$0xff]
    %v41 = vld [vmem:[#allocation2 + $0x8] sm:$0xff]
    %v42 = vld [vmem:[#allocation5] sm:$0xff]
    %v43 = vld [vmem:[#allocation5 + $0x8] sm:$0xff]
    %v44 = vld [vmem:[#allocation5 + $0x10] sm:$0xff]
    %v45 = vld [vmem:[#allocation5 + $0x18] sm:$0xff]
    %v46 = vld [vmem:[#allocation5 + $0x20] sm:$0xff]
    %v47 = vld [vmem:[#allocation5 + $0x28] sm:$0xff]
    %v48 = vld [vmem:[#allocation5 + $0x30] sm:$0xff]
    %v49 = vld [vmem:[#allocation5 + $0x38] sm:$0xff]
    %v50 = vld [vmem:[#allocation5 + $0x40] sm:$0xff]
    %v51 = vld [vmem:[#allocation5 + $0x48] sm:$0xff]
    %v52 = vld [vmem:[#allocation5 + $0x50] sm:$0xff]
    %v53 = vld [vmem:[#allocation5 + $0x58] sm:$0xff]
    %v54 = vld [vmem:[#allocation5 + $0x60] sm:$0xff]
    %v55 = vld [vmem:[#allocation5 + $0x68] sm:$0xff]
    %v56 = vld [vmem:[#allocation5 + $0x70] sm:$0xff]
    %v57 = vld [vmem:[#allocation5 + $0x78] sm:$0xff]
    %v58 = vld [vmem:[#allocation5 + $0x80] sm:$0xff]
    %v59 = vld [vmem:[#allocation5 + $0x88] sm:$0xff]
    %v60 = vld [vmem:[#allocation5 + $0x90] sm:$0xff]
    %v61 = vld [vmem:[#allocation5 + $0x98] sm:$0xff]
    %v62 = vld [vmem:[#allocation5 + $0xa0] sm:$0xff]
    %v63 = vld [vmem:[#allocation5 + $0xa8] sm:$0xff]
    %v64 = vld [vmem:[#allocation5 + $0xb0] sm:$0xff]
    %v65 = vld [vmem:[#allocation5 + $0xb8] sm:$0xff]
    %v66 = vld [vmem:[#allocation5 + $0xc0] sm:$0xff]
    %v67 = vld [vmem:[#allocation5 + $0xc8] sm:$0xff]
    %v68 = vld [vmem:[#allocation5 + $0xd0] sm:$0xff]
    %v69 = vld [vmem:[#allocation5 + $0xd8] sm:$0xff]
    %v70 = vld [vmem:[#allocation5 + $0xe0] sm:$0xff]
    %v71 = vld [vmem:[#allocation5 + $0xe8] sm:$0xff]
    %v72 = vld [vmem:[#allocation5 + $0xf0] sm:$0xff]
    %v73 = vld [vmem:[#allocation5 + $0xf8] sm:$0xff]
    %v74 = vld [vmem:[#allocation5 + $0x100] sm:$0xff]
    %v75 = vld [vmem:[#allocation5 + $0x108] sm:$0xff]
    %v76 = vld [vmem:[#allocation5 + $0x110] sm:$0xff]
    %v77 = vld [vmem:[#allocation5 + $0x118] sm:$0xff]
    %v78 = vld [vmem:[#allocation5 + $0x120] sm:$0x7]
    %v79 = vld [vmem:[#allocation5 + $0x128] sm:$0x7]
    %v80 = vld [vmem:[#allocation5 + $0x130] sm:$0x7]
    %v81 = vld [vmem:[#allocation5 + $0x138] sm:$0x7]
    %vm82 = vcmask 613376
    %v84 = vsel %vm82, %v40, 0
    %v87 = vsel %vm82, %v41, 0
    %vm89 = vcmask 1042432
    %v91 = vsel %vm89, %v78, 0
    %v94 = vsel %vm89, %v79, 0
    %v97 = vsel %vm89, %v80, 0
    %v100 = vsel %vm89, %v81, 0
    %102 = vmatprep.subr.mxu0 %v43
    %103 = vmatpush1.msra.mxu0 %v42
    %104 = vmatprep.subr.mxu0 %v47
    %105 = vmatpush1.msra.mxu0 %v46
    %106 = vmatprep.subr.mxu0 %v51
    %107 = vmatpush1.msra.mxu0 %v50
    %108 = vmatprep.subr.mxu0 %v55
    %109 = vmatpush1.msra.mxu0 %v54
    %110 = vmatprep.subr.mxu0 %v59
    %111 = vmatpush1.msra.mxu0 %v58
    %112 = vmatprep.subr.mxu0 %v63
    %113 = vmatpush1.msra.mxu0 %v62
    %114 = vmatprep.subr.mxu0 %v67
    %115 = vmatpush1.msra.mxu0 %v66
    %116 = vmatprep.subr.mxu0 %v71
    %117 = vmatpush1.msra.mxu0 %v70
    %118 = vmatprep.subr.mxu0 %v75
    %119 = vmatpush1.msra.mxu0 %v74
    %120 = vmatprep.subr.mxu0 %v94
    %121 = vmatpush1.msra.mxu0 %v91
    %122 = vmatprep.subr.mxu0 0.0
    %123 = vmatpush1.msra.mxu0 0.0
    %124 = vmatprep.subr.mxu0 0.0
    %125 = vmatpush1.msra.mxu0 0.0
    %126 = vmatprep.subr.mxu0 0.0
    %127 = vmatpush1.msra.mxu0 0.0
    %128 = vmatprep.subr.mxu0 0.0
    %129 = vmatpush1.msra.mxu0 0.0
    %130 = vmatprep.subr.mxu0 0.0
    %131 = vmatpush1.msra.mxu0 0.0
    %132 = vmatprep.subr.mxu0 0.0
    %133 = vmatpush1.msra.mxu0 0.0
    %134 = vmatprep.subr.mxu0 0.0
    %135 = vmatpush1.msra.mxu0 0.0
    %136 = vmatprep.subr.mxu0 0.0
    %137 = vmatpush1.msra.mxu0 0.0
    %138 = vmatprep.subr.mxu0 0.0
    %139 = vmatpush1.msra.mxu0 0.0
    %140 = vmatprep.subr.mxu0 0.0
    %141 = vmatpush1.msra.mxu0 0.0
    %142 = vmatprep.subr.mxu0 0.0
    %143 = vmatpush1.msra.mxu0 0.0
    %144 = vmatprep.subr.mxu0 0.0
    %145 = vmatpush1.msra.mxu0 0.0
    %146 = vmatprep.subr.mxu0 0.0
    %147 = vmatpush1.msra.mxu0 0.0
    %148 = vmatprep.subr.mxu0 0.0
    %149 = vmatpush1.msra.mxu0 0.0
    %150 = vmatprep.subr.mxu0 0.0
    %151 = vmatpush1.msra.mxu0 0.0
    %152 = vmatprep.subr.mxu0 0.0
    %153 = vmatpush1.msra.mxu0 0.0
    %154 = vmatprep.subr.mxu0 0.0
    %155 = vmatpush1.msra.mxu0 0.0
    %156 = vmatprep.subr.mxu0 0.0
    %157 = vmatpush1.msra.mxu0 0.0
    %158 = vmatprep.subr.mxu0 0.0
    %159 = vmatpush1.msra.mxu0 0.0
    %160 = vmatprep.subr.mxu0 0.0
    %161 = vmatpush1.msra.mxu0 0.0
    %162 = vmatprep.subr.mxu0 0.0
    %163 = vmatpush1.msra.mxu0 0.0
    %164 = vmatprep.subr.mxu0 0.0
    %165 = vmatpush1.msra.mxu0 0.0
    %166 = vmatprep.mubr.f32.mxu0 0.0
    %167 = vmatmul.mubr.f32.gmra.mrb[0].mxu0 %v84
    %v168 = vpop.f32.mrb[0].mxu0
    %v169 = vadd.f32 0.0, %v168
    %v170 = vpop.f32.mrb[0].mxu0
    %v171 = vadd.f32 0.0, %v170
    %172 = vmatprep.mubr.f32.mxu0 0.0
    %173 = vmatmul.mubr.f32.gmra.mrb[0].mxu0 %v87
    %v174 = vpop.f32.mrb[0].mxu0
    %v175 = vadd.f32 0.0, %v174
    %v176 = vpop.f32.mrb[0].mxu0
    %v177 = vadd.f32 0.0, %v176
    %178 = vdwg.mxu0
    %179 = vmatprep.subr.mxu0 %v45
    %180 = vmatpush1.msra.mxu0 %v44
    %181 = vmatprep.subr.mxu0 %v49
    %182 = vmatpush1.msra.mxu0 %v48
    %183 = vmatprep.subr.mxu0 %v53
    %184 = vmatpush1.msra.mxu0 %v52
    %185 = vmatprep.subr.mxu0 %v57
    %186 = vmatpush1.msra.mxu0 %v56
    %187 = vmatprep.subr.mxu0 %v61
    %188 = vmatpush1.msra.mxu0 %v60
    %189 = vmatprep.subr.mxu0 %v65
    %190 = vmatpush1.msra.mxu0 %v64
    %191 = vmatprep.subr.mxu0 %v69
    %192 = vmatpush1.msra.mxu0 %v68
    %193 = vmatprep.subr.mxu0 %v73
    %194 = vmatpush1.msra.mxu0 %v72
    %195 = vmatprep.subr.mxu0 %v77
    %196 = vmatpush1.msra.mxu0 %v76
    %197 = vmatprep.subr.mxu0 %v100
    %198 = vmatpush1.msra.mxu0 %v97
    %199 = vmatprep.subr.mxu0 0.0
    %200 = vmatpush1.msra.mxu0 0.0
    %201 = vmatprep.subr.mxu0 0.0
    %202 = vmatpush1.msra.mxu0 0.0
    %203 = vmatprep.subr.mxu0 0.0
    %204 = vmatpush1.msra.mxu0 0.0
    %205 = vmatprep.subr.mxu0 0.0
    %206 = vmatpush1.msra.mxu0 0.0
    %207 = vmatprep.subr.mxu0 0.0
    %208 = vmatpush1.msra.mxu0 0.0
    %209 = vmatprep.subr.mxu0 0.0
    %210 = vmatpush1.msra.mxu0 0.0
    %211 = vmatprep.subr.mxu0 0.0
    %212 = vmatpush1.msra.mxu0 0.0
    %213 = vmatprep.subr.mxu0 0.0
    %214 = vmatpush1.msra.mxu0 0.0
    %215 = vmatprep.subr.mxu0 0.0
    %216 = vmatpush1.msra.mxu0 0.0
    %217 = vmatprep.subr.mxu0 0.0
    %218 = vmatpush1.msra.mxu0 0.0
    %219 = vmatprep.subr.mxu0 0.0
    %220 = vmatpush1.msra.mxu0 0.0
    %221 = vmatprep.subr.mxu0 0.0
    %222 = vmatpush1.msra.mxu0 0.0
    %223 = vmatprep.subr.mxu0 0.0
    %224 = vmatpush1.msra.mxu0 0.0
    %225 = vmatprep.subr.mxu0 0.0
    %226 = vmatpush1.msra.mxu0 0.0
    %227 = vmatprep.subr.mxu0 0.0
    %228 = vmatpush1.msra.mxu0 0.0
    %229 = vmatprep.subr.mxu0 0.0
    %230 = vmatpush1.msra.mxu0 0.0
    %231 = vmatprep.subr.mxu0 0.0
    %232 = vmatpush1.msra.mxu0 0.0
    %233 = vmatprep.subr.mxu0 0.0
    %234 = vmatpush1.msra.mxu0 0.0
    %235 = vmatprep.subr.mxu0 0.0
    %236 = vmatpush1.msra.mxu0 0.0
    %237 = vmatprep.subr.mxu0 0.0
    %238 = vmatpush1.msra.mxu0 0.0
    %239 = vmatprep.subr.mxu0 0.0
    %240 = vmatpush1.msra.mxu0 0.0
    %241 = vmatprep.subr.mxu0 0.0
    %242 = vmatpush1.msra.mxu0 0.0
    %243 = vmatprep.mubr.f32.mxu0 0.0
    %244 = vmatmul.mubr.f32.gmra.mrb[0].mxu0 %v84
    %v245 = vpop.f32.mrb[0].mxu0
    %v246 = vadd.f32 0.0, %v245
    %v247 = vpop.f32.mrb[0].mxu0
    %v248 = vadd.f32 0.0, %v247
    %249 = vmatprep.mubr.f32.mxu0 0.0
    %250 = vmatmul.mubr.f32.gmra.mrb[0].mxu0 %v87
    %v251 = vpop.f32.mrb[0].mxu0
    %v252 = vadd.f32 0.0, %v251
    %v253 = vpop.f32.mrb[0].mxu0
    %v254 = vadd.f32 0.0, %v253
    %255 = vdwg.mxu0
    %v256 = vmax.f32 %v169, 0.0
    %v257 = vmax.f32 %v171, 0.0
    %v258 = vmax.f32 %v246, 0.0
    %v259 = vmax.f32 %v248, 0.0
    %v260 = vmax.f32 %v175, 0.0
    %v261 = vmax.f32 %v177, 0.0
    %v262 = vmax.f32 %v252, 0.0
    %v263 = vmax.f32 %v254, 0.0
    %264 = vst [vmem:[#allocation7] sm:$0xff] %v256
    %265 = vst [vmem:[#allocation7 + $0x8] sm:$0xff] %v257
    %266 = vst [vmem:[#allocation7 + $0x10] sm:$0xff] %v258
    %267 = vst [vmem:[#allocation7 + $0x18] sm:$0xff] %v259
    %268 = vst [vmem:[#allocation7 + $0x20] sm:$0xff] %v260
    %269 = vst [vmem:[#allocation7 + $0x28] sm:$0xff] %v261
    %270 = vst [vmem:[#allocation7 + $0x30] sm:$0xff] %v262
    %271 = vst [vmem:[#allocation7 + $0x38] sm:$0xff] %v263
    // Predicated region
    $region18: #{tpu_custom_call.1} parent=1 // pred_check
      _
    $region19: #{tpu_custom_call.1} parent=1 // pred_check_branch
      %273 = sbr.rel (0) target = $region21
    $region20: #{tpu_custom_call.1} parent=1 // pred_region
      %s275 = ssub.s32 1024, 1024
      %276 = vsyncadd [#allocation4], %s275
      %s277 = sshll.u32 [#allocation7], 4
      %s278 = int_to_ptr.vmem [resolvable:$true] %s277
      %283 = dma.vmem_to_hbm [thread:$0]  %s278, 1024, %s2, [#allocation4], 512, 512, 32
    $region21: #{tpu_custom_call.1} parent=1 // pred_fallthru
      _
    // Predicated region
    $region22: #{tpu_custom_call.1} parent=1 // pred_check
      _
    $region23: #{tpu_custom_call.1} parent=1 // pred_check_branch
      %285 = sbr.rel (0) target = $region25
    $region24: #{tpu_custom_call.1} parent=1 // pred_region
      %286 = dma.done [#allocation4], 1024
    $region25: #{tpu_custom_call.1} parent=1 // pred_fallthru
      _
    %287 = vsyncpa [#allocation3], 1
    %288 = vsyncpa [#allocation6], 1
    %289 = vsyncpa [#allocation4], 1

</llo_original>
